<compile_context>
chip_gen: v5e
topology: v5e:2x2
jax: 0.10.0
libtpu: 0.0.40
codegen_flags: <defaults>
</compile_context>

<pallas_src>
import jax
import jax.numpy as jnp
from jax.experimental import pallas as pl
from jax.experimental.pallas import tpu as pltpu


def _tutorial_attention_kernel(emb_ref, hid_ref, enc_ref,
                               w_attn_e_ref, w_attn_h_ref, b_attn_ref,
                               w_comb_e_ref, w_comb_a_ref, b_comb_ref,
                               out_ref):
    emb = emb_ref[...]                       # (Tb, E)
    hid = hid_ref[...]                       # (Tb, Hd)
    enc = enc_ref[...]                       # (S, Tb, He)

    # attn linear as two dots (weights already sliced to the live S columns)
    logits = (jnp.dot(emb, w_attn_e_ref[...], preferred_element_type=jnp.float32)
              + jnp.dot(hid, w_attn_h_ref[...], preferred_element_type=jnp.float32)
              + b_attn_ref[...])                                          # (Tb, S)

    # numerically stable softmax over the sequence axis
    m = jnp.max(logits, axis=1, keepdims=True)
    e = jnp.exp(logits - m)
    attn_weights = e / jnp.sum(e, axis=1, keepdims=True)                  # (Tb, S)

    # attn_applied[b, h] = sum_s w[b, s] * enc[s, b, h]
    # one tiny (Tb, S) transpose, then a reduce over the leading (non-sublane)
    # axis -> plain vreg accumulation, no XLU sublane reduction.
    w_t = attn_weights.T                                                  # (S, Tb)
    attn_applied = jnp.sum(w_t[:, :, None] * enc, axis=0)                 # (Tb, He)

    # combine linear as two dots (no concat)
    out = (jnp.dot(emb, w_comb_e_ref[...], preferred_element_type=jnp.float32)
           + jnp.dot(attn_applied, w_comb_a_ref[...],
                     preferred_element_type=jnp.float32)
           + b_comb_ref[...])                                             # (Tb, E)
    out_ref[...] = out.astype(out_ref.dtype)


def _pick_tile_b(B):
    # Whole batch if it's tiny/irregular; otherwise a multiple-of-8 divisor
    # capped at 256 rows so enc tiles stay well inside v7x VMEM when scaled.
    if B % 8 != 0:
        return B
    tb = min(B, 256)
    while B % tb:
        tb -= 8
    return tb


def tutorial_attention(decoder_embeds, decoder_past_hidden, encoder_states,
                       w_attn, b_attn, w_comb, b_comb):
    """decoder_embeds: (1,B,E), decoder_past_hidden: (1,B,Hd),
       encoder_states: (S,B,He). Returns (1,B,E)."""
    emb = decoder_embeds[0]                                  # (B, E)
    hid = decoder_past_hidden[0]                             # (B, Hd)
    enc = encoder_states                                     # (S, B, He) -- no transpose
    S, B, He = enc.shape
    E = emb.shape[1]
    Hd = hid.shape[1]

    # Pre-slice the attn projection to the live S columns and split both
    # weight matrices along their input rows (removes in-kernel concats).
    w_attn_e = w_attn[:E, :S]                                # (E,  S)
    w_attn_h = w_attn[E:, :S]                                # (Hd, S)
    b_attn_s = b_attn[:S].reshape(1, S)                      # (1,  S)
    w_comb_e = w_comb[:E, :]                                 # (E,  E)
    w_comb_a = w_comb[E:, :]                                 # (He, E)
    b_comb_r = b_comb.reshape(1, E)                          # (1,  E)

    tb = _pick_tile_b(B)
    grid = (pl.cdiv(B, tb),)

    flops = 2 * B * (E * S + Hd * S + S * He + E * E + He * E)
    bytes_accessed = 4 * (emb.size + hid.size + enc.size
                          + w_attn_e.size + w_attn_h.size + S
                          + w_comb_e.size + w_comb_a.size + E + B * E)

    out = pl.pallas_call(
        _tutorial_attention_kernel,
        out_shape=jax.ShapeDtypeStruct((B, E), emb.dtype),
        grid=grid,
        in_specs=[
            pl.BlockSpec((tb, E), lambda i: (i, 0)),          # emb    (batch-tiled)
            pl.BlockSpec((tb, Hd), lambda i: (i, 0)),         # hid    (batch-tiled)
            pl.BlockSpec((S, tb, He), lambda i: (0, i, 0)),   # enc    (batch-tiled)
            pl.BlockSpec((E, S), lambda i: (0, 0)),           # w_attn_e (resident)
            pl.BlockSpec((Hd, S), lambda i: (0, 0)),          # w_attn_h (resident)
            pl.BlockSpec((1, S), lambda i: (0, 0)),           # b_attn   (resident)
            pl.BlockSpec((E, E), lambda i: (0, 0)),           # w_comb_e (resident)
            pl.BlockSpec((He, E), lambda i: (0, 0)),          # w_comb_a (resident)
            pl.BlockSpec((1, E), lambda i: (0, 0)),           # b_comb   (resident)
        ],
        out_specs=pl.BlockSpec((tb, E), lambda i: (i, 0)),
        compiler_params=pltpu.CompilerParams(
            dimension_semantics=("parallel",),
            vmem_limit_bytes=64 << 20),
        cost_estimate=pl.CostEstimate(flops=int(flops),
                                      transcendentals=int(B * S),
                                      bytes_accessed=int(bytes_accessed)),
    )(emb, hid, enc,
      w_attn_e, w_attn_h, b_attn_s,
      w_comb_e, w_comb_a, b_comb_r)
    return out[None]                                         # (1, B, E)


def _reference(decoder_embeds, decoder_past_hidden, encoder_states,
               w_attn, b_attn, w_comb, b_comb):
    emb = decoder_embeds[0]
    hid = decoder_past_hidden[0]
    S = encoder_states.shape[0]
    embed_hidden = jnp.concatenate([emb, hid], axis=1)
    logits = (embed_hidden @ w_attn + b_attn)[:, :S]
    w = jax.nn.softmax(logits, axis=1)
    enc = jnp.transpose(encoder_states, (1, 0, 2))
    applied = jnp.einsum("bs,bsh->bh", w, enc)
    combined = jnp.concatenate([emb, applied], axis=1)
    return (combined @ w_comb + b_comb)[None]


if __name__ == "__main__":
    # Small synthetic config (embedding_size=E, dec hidden=Hd, enc output He=2*Hd,
    # max_length=L, encoder seq len S <= L, batch B).
    B, E, Hd, S, L = 4, 32, 32, 8, 16
    He = 2 * Hd

    key = jax.random.PRNGKey(0)
    k = jax.random.split(key, 7)

    decoder_embeds = jax.random.normal(k[0], (1, B, E), jnp.float32)
    decoder_past_hidden = jax.random.normal(k[1], (1, B, Hd), jnp.float32)
    encoder_states = jax.random.normal(k[2], (S, B, He), jnp.float32)

    # Deterministic PyTorch-Linear-style init (uniform +-1/sqrt(fan_in)),
    # stored pre-transposed as (in_features, out_features).
    fan_attn = E + Hd
    bound_a = 1.0 / jnp.sqrt(fan_attn)
    w_attn = jax.random.uniform(k[3], (fan_attn, L), jnp.float32, -bound_a, bound_a)
    b_attn = jax.random.uniform(k[4], (L,), jnp.float32, -bound_a, bound_a)

    fan_comb = He + E  # == dec_hidden*2 + embedding_size
    bound_c = 1.0 / jnp.sqrt(fan_comb)
    w_comb = jax.random.uniform(k[5], (fan_comb, E), jnp.float32, -bound_c, bound_c)
    b_comb = jax.random.uniform(k[6], (E,), jnp.float32, -bound_c, bound_c)

    out = tutorial_attention(decoder_embeds, decoder_past_hidden, encoder_states,
                             w_attn, b_attn, w_comb, b_comb)
    out = jax.block_until_ready(out)

    ref = _reference(decoder_embeds, decoder_past_hidden, encoder_states,
                     w_attn, b_attn, w_comb, b_comb)
    assert out.shape == (1, B, E), out.shape
    assert jnp.allclose(out, ref, atol=1e-5, rtol=1e-5), "mismatch vs reference"

    print("KERNEL_OK")
</pallas_src>

<mosaic_0001>
module attributes {stable_mosaic.version = 11 : i64} {
  func.func @_tutorial_attention_kernel(%arg0: i32, %arg1: memref<4x32xf32, #tpu.memory_space<vmem>>, %arg2: memref<4x32xf32, #tpu.memory_space<vmem>>, %arg3: memref<8x4x64xf32, #tpu.memory_space<vmem>>, %arg4: memref<32x8xf32, #tpu.memory_space<vmem>>, %arg5: memref<32x8xf32, #tpu.memory_space<vmem>>, %arg6: memref<1x8xf32, #tpu.memory_space<vmem>>, %arg7: memref<32x32xf32, #tpu.memory_space<vmem>>, %arg8: memref<64x32xf32, #tpu.memory_space<vmem>>, %arg9: memref<1x32xf32, #tpu.memory_space<vmem>>, %arg10: memref<4x32xf32, #tpu.memory_space<vmem>>) attributes {dimension_semantics = [#tpu.dimension_semantics<parallel>], iteration_bounds = array<i64: 1>, scalar_prefetch = 0 : i64, scratch_operands = 0 : i64, tpu.core_type = #tpu.core_type<tc>, window_params = [{transform_indices = @transform_0, window_bounds = array<i64: 4, 32>}, {transform_indices = @transform_1, window_bounds = array<i64: 4, 32>}, {transform_indices = @transform_2, window_bounds = array<i64: 8, 4, 64>}, {pipeline_mode = #tpu.pipeline_mode<synchronous>, transform_indices = @transform_3, window_bounds = array<i64: 32, 8>}, {pipeline_mode = #tpu.pipeline_mode<synchronous>, transform_indices = @transform_4, window_bounds = array<i64: 32, 8>}, {pipeline_mode = #tpu.pipeline_mode<synchronous>, transform_indices = @transform_5, window_bounds = array<i64: 1, 8>}, {pipeline_mode = #tpu.pipeline_mode<synchronous>, transform_indices = @transform_6, window_bounds = array<i64: 32, 32>}, {pipeline_mode = #tpu.pipeline_mode<synchronous>, transform_indices = @transform_7, window_bounds = array<i64: 64, 32>}, {pipeline_mode = #tpu.pipeline_mode<synchronous>, transform_indices = @transform_8, window_bounds = array<i64: 1, 32>}, {transform_indices = @transform_9, window_bounds = array<i64: 4, 32>}]} {
    %c0 = arith.constant 0 : index
    %c0_0 = arith.constant 0 : index
    %0 = vector.load %arg1[%c0, %c0_0] : memref<4x32xf32, #tpu.memory_space<vmem>>, vector<4x32xf32>
    %c0_1 = arith.constant 0 : index
    %c0_2 = arith.constant 0 : index
    %1 = vector.load %arg2[%c0_1, %c0_2] : memref<4x32xf32, #tpu.memory_space<vmem>>, vector<4x32xf32>
    %c0_3 = arith.constant 0 : index
    %c0_4 = arith.constant 0 : index
    %c0_5 = arith.constant 0 : index
    %2 = vector.load %arg3[%c0_3, %c0_4, %c0_5] : memref<8x4x64xf32, #tpu.memory_space<vmem>>, vector<8x4x64xf32>
    %c0_6 = arith.constant 0 : index
    %c0_7 = arith.constant 0 : index
    %3 = vector.load %arg4[%c0_6, %c0_7] : memref<32x8xf32, #tpu.memory_space<vmem>>, vector<32x8xf32>
    %cst = arith.constant dense<0.000000e+00> : vector<4x8xf32>
    %4 = tpu.matmul %0, %3, %cst {dimension_numbers = #tpu.dot_dimension_numbers<[1], [0], [0], [1], [0, 0, 1, 1], [], []>} : vector<4x32xf32>, vector<32x8xf32>, vector<4x8xf32> -> vector<4x8xf32>
    %c0_8 = arith.constant 0 : index
    %c0_9 = arith.constant 0 : index
    %5 = vector.load %arg5[%c0_8, %c0_9] : memref<32x8xf32, #tpu.memory_space<vmem>>, vector<32x8xf32>
    %cst_10 = arith.constant dense<0.000000e+00> : vector<4x8xf32>
    %6 = tpu.matmul %1, %5, %cst_10 {dimension_numbers = #tpu.dot_dimension_numbers<[1], [0], [0], [1], [0, 0, 1, 1], [], []>} : vector<4x32xf32>, vector<32x8xf32>, vector<4x8xf32> -> vector<4x8xf32>
    %7 = arith.addf %4, %6 : vector<4x8xf32>
    %c0_11 = arith.constant 0 : index
    %c0_12 = arith.constant 0 : index
    %8 = vector.load %arg6[%c0_11, %c0_12] : memref<1x8xf32, #tpu.memory_space<vmem>>, vector<1x8xf32>
    %9 = vector.broadcast %8 : vector<1x8xf32> to vector<4x8xf32>
    %10 = arith.addf %7, %9 : vector<4x8xf32>
    %cst_13 = arith.constant dense<0xFF800000> : vector<4xf32>
    %11 = vector.multi_reduction <maximumf>, %10, %cst_13 [1] : vector<4x8xf32> to vector<4xf32>
    %12 = vector.shape_cast %11 : vector<4xf32> to vector<4x1xf32>
    %13 = vector.broadcast %12 : vector<4x1xf32> to vector<4x8xf32>
    %14 = arith.subf %10, %13 : vector<4x8xf32>
    %15 = math.exp %14 : vector<4x8xf32>
    %cst_14 = arith.constant dense<0.000000e+00> : vector<4xf32>
    %16 = vector.multi_reduction <add>, %15, %cst_14 [1] : vector<4x8xf32> to vector<4xf32>
    %17 = vector.shape_cast %16 : vector<4xf32> to vector<4x1xf32>
    %18 = vector.broadcast %17 : vector<4x1xf32> to vector<4x8xf32>
    %19 = arith.divf %15, %18 : vector<4x8xf32>
    %20 = tpu.transpose %19, [1, 0] : vector<4x8xf32> -> vector<8x4xf32>
    %21 = vector.shape_cast %20 : vector<8x4xf32> to vector<8x4x1xf32>
    %22 = vector.broadcast %21 : vector<8x4x1xf32> to vector<8x4x64xf32>
    %23 = arith.mulf %22, %2 : vector<8x4x64xf32>
    %cst_15 = arith.constant dense<0.000000e+00> : vector<4x64xf32>
    %24 = vector.multi_reduction <add>, %23, %cst_15 [0] : vector<8x4x64xf32> to vector<4x64xf32>
    %c0_16 = arith.constant 0 : index
    %c0_17 = arith.constant 0 : index
    %25 = vector.load %arg7[%c0_16, %c0_17] : memref<32x32xf32, #tpu.memory_space<vmem>>, vector<32x32xf32>
    %cst_18 = arith.constant dense<0.000000e+00> : vector<4x32xf32>
    %26 = tpu.matmul %0, %25, %cst_18 {dimension_numbers = #tpu.dot_dimension_numbers<[1], [0], [0], [1], [0, 0, 1, 1], [], []>} : vector<4x32xf32>, vector<32x32xf32>, vector<4x32xf32> -> vector<4x32xf32>
    %c0_19 = arith.constant 0 : index
    %c0_20 = arith.constant 0 : index
    %27 = vector.load %arg8[%c0_19, %c0_20] : memref<64x32xf32, #tpu.memory_space<vmem>>, vector<64x32xf32>
    %cst_21 = arith.constant dense<0.000000e+00> : vector<4x32xf32>
    %28 = tpu.matmul %24, %27, %cst_21 {dimension_numbers = #tpu.dot_dimension_numbers<[1], [0], [0], [1], [0, 0, 1, 1], [], []>} : vector<4x64xf32>, vector<64x32xf32>, vector<4x32xf32> -> vector<4x32xf32>
    %29 = arith.addf %26, %28 : vector<4x32xf32>
    %c0_22 = arith.constant 0 : index
    %c0_23 = arith.constant 0 : index
    %30 = vector.load %arg9[%c0_22, %c0_23] : memref<1x32xf32, #tpu.memory_space<vmem>>, vector<1x32xf32>
    %31 = vector.broadcast %30 : vector<1x32xf32> to vector<4x32xf32>
    %32 = arith.addf %29, %31 : vector<4x32xf32>
    %c0_24 = arith.constant 0 : index
    %c0_25 = arith.constant 0 : index
    %33 = vector.load %arg10[%c0_24, %c0_25] : memref<4x32xf32, #tpu.memory_space<vmem>>, vector<4x32xf32>
    tpu.vector_store %arg10[%c0_24, %c0_25], %32 {strides = array<i32>} : memref<4x32xf32, #tpu.memory_space<vmem>>, vector<4x32xf32>,
    return
  }
  func.func @transform_0(%arg0: i32) -> (i32, i32) {
    %c0_i32 = arith.constant 0 : i32
    %c0_i32_0 = arith.constant 0 : i32
    return %arg0, %c0_i32 : i32, i32
  }
  func.func @transform_1(%arg0: i32) -> (i32, i32) {
    %c0_i32 = arith.constant 0 : i32
    %c0_i32_0 = arith.constant 0 : i32
    return %arg0, %c0_i32 : i32, i32
  }
  func.func @transform_2(%arg0: i32) -> (i32, i32, i32) {
    %c0_i32 = arith.constant 0 : i32
    %c0_i32_0 = arith.constant 0 : i32
    %c0_i32_1 = arith.constant 0 : i32
    return %c0_i32, %arg0, %c0_i32_0 : i32, i32, i32
  }
  func.func @transform_3(%arg0: i32) -> (i32, i32) {
    %c0_i32 = arith.constant 0 : i32
    %c0_i32_0 = arith.constant 0 : i32
    %c0_i32_1 = arith.constant 0 : i32
    return %c0_i32, %c0_i32_0 : i32, i32
  }
  func.func @transform_4(%arg0: i32) -> (i32, i32) {
    %c0_i32 = arith.constant 0 : i32
    %c0_i32_0 = arith.constant 0 : i32
    %c0_i32_1 = arith.constant 0 : i32
    return %c0_i32, %c0_i32_0 : i32, i32
  }
  func.func @transform_5(%arg0: i32) -> (i32, i32) {
    %c0_i32 = arith.constant 0 : i32
    %c0_i32_0 = arith.constant 0 : i32
    %c0_i32_1 = arith.constant 0 : i32
    return %c0_i32, %c0_i32_0 : i32, i32
  }
  func.func @transform_6(%arg0: i32) -> (i32, i32) {
    %c0_i32 = arith.constant 0 : i32
    %c0_i32_0 = arith.constant 0 : i32
    %c0_i32_1 = arith.constant 0 : i32
    return %c0_i32, %c0_i32_0 : i32, i32
  }
  func.func @transform_7(%arg0: i32) -> (i32, i32) {
    %c0_i32 = arith.constant 0 : i32
    %c0_i32_0 = arith.constant 0 : i32
    %c0_i32_1 = arith.constant 0 : i32
    return %c0_i32, %c0_i32_0 : i32, i32
  }
  func.func @transform_8(%arg0: i32) -> (i32, i32) {
    %c0_i32 = arith.constant 0 : i32
    %c0_i32_0 = arith.constant 0 : i32
    %c0_i32_1 = arith.constant 0 : i32
    return %c0_i32, %c0_i32_0 : i32, i32
  }
  func.func @transform_9(%arg0: i32) -> (i32, i32) {
    %c0_i32 = arith.constant 0 : i32
    %c0_i32_0 = arith.constant 0 : i32
    return %arg0, %c0_i32 : i32, i32
  }
}

</mosaic_0001>

<llo_original>
// kernel: tpu_custom_call.1
$region0: #{tpu_custom_call.1}
  #allocation0 [shape = 'u32[]', space=smem, size = 0x4, offset = 0x4, fixed_abs, tag = 'smem constant byte address 0x4 - core index']
  #allocation1 [shape = 'u32[72,128]{1,0:T(1,128)}', space=vmem, size = 0x9000, scoped, tag = 'internal scratch']
  %s0 = inlined_call_operand.vmem [shape: f32[4,32], index: 0, kind: input, shape index: {}]
  %s1 = inlined_call_operand.vmem [shape: f32[4,32], index: 1, kind: input, shape index: {}]
  %s2 = inlined_call_operand.vmem [shape: f32[8,4,64], index: 2, kind: input, shape index: {}]
  %s3 = inlined_call_operand.vmem [shape: f32[32,8], index: 3, kind: input, shape index: {}]
  %s4 = inlined_call_operand.vmem [shape: f32[32,8], index: 4, kind: input, shape index: {}]
  %s5 = inlined_call_operand.vmem [shape: f32[1,8], index: 5, kind: input, shape index: {}]
  %s6 = inlined_call_operand.vmem [shape: f32[32,32], index: 6, kind: input, shape index: {}]
  %s7 = inlined_call_operand.vmem [shape: f32[64,32], index: 7, kind: input, shape index: {}]
  %s8 = inlined_call_operand.vmem [shape: f32[1,32], index: 8, kind: input, shape index: {}]
  %s9 = inlined_call_operand.hbm [shape: f32[4,32], index: 9, kind: output, shape index: {}]
  %s10 = sld [smem:[#allocation0]]
  $region46: #{tpu_custom_call.1} parent=0
    _
  %s12 = ssub.s32 1, %s10
  %s13 = scalar_select 0, %s12, %s10
  $region1: #{tpu_custom_call.1} parent=0
    #allocation2 [shape = 'u8[2048]{0}', space=vmem, size = 0x800, scoped, tag = 'output window, operand 0, single buffered']
    #allocation3 [shape = 's32[1]{0}', space=sflag, size = 0x4, scoped, tag = 'scoped memory for tpu_custom_call.1']
    %14 = vsyncpa [#allocation3], 0
    // Predicated region
    $region2: #{tpu_custom_call.1} parent=1 // pred_check
      _
    $region3: #{tpu_custom_call.1} parent=1 // pred_check_branch
      %16 = sbr.rel (0) target = $region5
    $region4: #{tpu_custom_call.1} parent=1 // pred_region
      _
    $region5: #{tpu_custom_call.1} parent=1 // pred_fallthru
      _
    // Predicated region
    $region6: #{tpu_custom_call.1} parent=1 // pred_check
      _
    $region7: #{tpu_custom_call.1} parent=1 // pred_check_branch
      %18 = sbr.rel (0) target = $region9
    $region8: #{tpu_custom_call.1} parent=1 // pred_region
      _
    $region9: #{tpu_custom_call.1} parent=1 // pred_fallthru
      _
    // Predicated region
    $region10: #{tpu_custom_call.1} parent=1 // pred_check
      _
    $region11: #{tpu_custom_call.1} parent=1 // pred_check_branch
      %20 = sbr.rel (0) target = $region13
    $region12: #{tpu_custom_call.1} parent=1 // pred_region
      _
    $region13: #{tpu_custom_call.1} parent=1 // pred_fallthru
      _
    // Predicated region
    $region14: #{tpu_custom_call.1} parent=1 // pred_check
      _
    $region15: #{tpu_custom_call.1} parent=1 // pred_check_branch
      %22 = sbr.rel (0) target = $region17
    $region16: #{tpu_custom_call.1} parent=1 // pred_region
      _
    $region17: #{tpu_custom_call.1} parent=1 // pred_fallthru
      _
    // Predicated region
    $region18: #{tpu_custom_call.1} parent=1 // pred_check
      _
    $region19: #{tpu_custom_call.1} parent=1 // pred_check_branch
      %24 = sbr.rel (0) target = $region21
    $region20: #{tpu_custom_call.1} parent=1 // pred_region
      _
    $region21: #{tpu_custom_call.1} parent=1 // pred_fallthru
      _
    // Predicated region
    $region22: #{tpu_custom_call.1} parent=1 // pred_check
      _
    $region23: #{tpu_custom_call.1} parent=1 // pred_check_branch
      %26 = sbr.rel (0) target = $region25
    $region24: #{tpu_custom_call.1} parent=1 // pred_region
      _
    $region25: #{tpu_custom_call.1} parent=1 // pred_fallthru
      _
    // Predicated region
    $region26: #{tpu_custom_call.1} parent=1 // pred_check
      _
    $region27: #{tpu_custom_call.1} parent=1 // pred_check_branch
      %28 = sbr.rel (0) target = $region29
    $region28: #{tpu_custom_call.1} parent=1 // pred_region
      _
    $region29: #{tpu_custom_call.1} parent=1 // pred_fallthru
      _
    // Predicated region
    $region30: #{tpu_custom_call.1} parent=1 // pred_check
      _
    $region31: #{tpu_custom_call.1} parent=1 // pred_check_branch
      %30 = sbr.rel (0) target = $region33
    $region32: #{tpu_custom_call.1} parent=1 // pred_region
      _
    $region33: #{tpu_custom_call.1} parent=1 // pred_fallthru
      _
    // Predicated region
    $region34: #{tpu_custom_call.1} parent=1 // pred_check
      _
    $region35: #{tpu_custom_call.1} parent=1 // pred_check_branch
      %32 = sbr.rel (0) target = $region37
    $region36: #{tpu_custom_call.1} parent=1 // pred_region
      _
    $region37: #{tpu_custom_call.1} parent=1 // pred_fallthru
      _
    %v33 = vld [vmem:[%s0] sm:$0xf]
    %v34 = vld [vmem:[%s1] sm:$0xf]
    %v35 = vld [vmem:[%s2] sm:$0xf]
    %v36 = vld [vmem:[%s2 + $0x4] sm:$0xf]
    %v37 = vld [vmem:[%s2 + $0x8] sm:$0xf]
    %v38 = vld [vmem:[%s2 + $0xc] sm:$0xf]
    %v39 = vld [vmem:[%s2 + $0x10] sm:$0xf]
    %v40 = vld [vmem:[%s2 + $0x14] sm:$0xf]
    %v41 = vld [vmem:[%s2 + $0x18] sm:$0xf]
    %v42 = vld [vmem:[%s2 + $0x1c] sm:$0xf]
    %v43 = vld [vmem:[%s3] sm:$0xff]
    %v44 = vld [vmem:[%s3 + $0x8] sm:$0xff]
    %v45 = vld [vmem:[%s3 + $0x10] sm:$0xff]
    %v46 = vld [vmem:[%s3 + $0x18] sm:$0xff]
    %v47 = vld [vmem:[%s4] sm:$0xff]
    %v48 = vld [vmem:[%s4 + $0x8] sm:$0xff]
    %v49 = vld [vmem:[%s4 + $0x10] sm:$0xff]
    %v50 = vld [vmem:[%s4 + $0x18] sm:$0xff]
    %vm51 = vcmask 261120
    %v53 = vsel %vm51, %v34, 0
    %55 = vmatpush.msra.mxu0 0.0
    %56 = vmatpush.msra.mxu0 0.0
    %57 = vmatpush.msra.mxu0 0.0
    %58 = vmatpush.msra.mxu0 0.0
    %59 = vmatpush.msra.mxu0 0.0
    %60 = vmatpush.msra.mxu0 0.0
    %61 = vmatpush.msra.mxu0 0.0
    %62 = vmatpush.msra.mxu0 0.0
    %63 = vmatpush.msra.mxu0 0.0
    %64 = vmatpush.msra.mxu0 0.0
    %65 = vmatpush.msra.mxu0 0.0
    %66 = vmatpush.msra.mxu0 0.0
    %67 = vmatpush.msra.mxu0 %v50
    %68 = vmatpush.msra.mxu0 %v49
    %69 = vmatpush.msra.mxu0 %v48
    %70 = vmatpush.msra.mxu0 %v47
    %71 = vmatmul.f32.gmra.mxu0 %v53
    %v72 = vpop.f32.mrf.mxu0
    %v73 = vadd.f32 0.0, %v72
    %74 = vdwg.mxu0
    %v76 = vsel %vm51, %v33, 0
    %78 = vmatpush.msra.mxu0 0.0
    %79 = vmatpush.msra.mxu0 0.0
    %80 = vmatpush.msra.mxu0 0.0
    %81 = vmatpush.msra.mxu0 0.0
    %82 = vmatpush.msra.mxu0 0.0
    %83 = vmatpush.msra.mxu0 0.0
    %84 = vmatpush.msra.mxu0 0.0
    %85 = vmatpush.msra.mxu0 0.0
    %86 = vmatpush.msra.mxu0 0.0
    %87 = vmatpush.msra.mxu0 0.0
    %88 = vmatpush.msra.mxu0 0.0
    %89 = vmatpush.msra.mxu0 0.0
    %90 = vmatpush.msra.mxu0 %v46
    %91 = vmatpush.msra.mxu0 %v45
    %92 = vmatpush.msra.mxu0 %v44
    %93 = vmatpush.msra.mxu0 %v43
    %94 = vmatmul.f32.gmra.mxu0 %v76
    %v95 = vpop.f32.mrf.mxu0
    %v96 = vadd.f32 %v73, %v95
    %97 = vdwg.mxu0
    %v98 = vld [vmem:[%s5] sm:$0x1]
    %v100 = vperm.slane %v98, 0
    %v102 = vadd.f32 %v96, %v100
    %vm103 = vcmask 60416
    %v104 = vsel %vm103, %v102, -inf
    %105 = vmax.xlane.f32.xlu0 %v104
    %v106 = vpop.xlane.xlu0 %105
    %v107 = vsub.f32 %v102, %v106
    %v108 = vmul.f32 %v107, 1.442695
    %v109 = vpow.pop %v108
    %v110 = vsel %vm103, %v109, 0.0
    %111 = vadd.xlane.f32.xlu0 %v110
    %v112 = vpop.xlane.xlu0 %111
    %v113 = vrcp.pop %v112
    %v114 = vmul.f32 %v112, %v113
    %v115 = vsub.f32 1.0, %v114
    %v116 = vmul.f32 %v113, %v115
    %v117 = vadd.f32 %v113, %v116
    %vm118 = vweird.f32 %v112
    %vm119 = vweird.f32 %v113
    %vm120 = vmor %vm118, %vm119
    %v121 = vsel %vm120, %v113, %v117
    %v122 = vand.u32 2147483647, %v112
    %vm123 = vcmp.eq.f32.partialorder %v122, 8.507059e+37
    %v124 = vand.u32 %v112, 2147483648
    %v125 = vor.u32 1.1754944e-38, %v124
    %v126 = vsel %vm123, %v125, %v121
    %v127 = vmul.f32 %v109, %v126
    %128 = vxpose.xlu0.b32.start [1/16] %v127, 128
    %129 = vxpose.xlu0.b32.cont [2/16] 0.0, 128
    %130 = vxpose.xlu0.b32.cont [3/16] 0.0, 128
    %131 = vxpose.xlu0.b32.cont [4/16] 0.0, 128
    %132 = vxpose.xlu0.b32.cont [5/16] 0.0, 128
    %133 = vxpose.xlu0.b32.cont [6/16] 0.0, 128
    %134 = vxpose.xlu0.b32.cont [7/16] 0.0, 128
    %135 = vxpose.xlu0.b32.cont [8/16] 0.0, 128
    %136 = vxpose.xlu0.b32.cont [9/16] 0.0, 128
    %137 = vxpose.xlu0.b32.cont [10/16] 0.0, 128
    %138 = vxpose.xlu0.b32.cont [11/16] 0.0, 128
    %139 = vxpose.xlu0.b32.cont [12/16] 0.0, 128
    %140 = vxpose.xlu0.b32.cont [13/16] 0.0, 128
    %141 = vxpose.xlu0.b32.cont [14/16] 0.0, 128
    %142 = vxpose.xlu0.b32.cont [15/16] 0.0, 128
    %143 = vxpose.xlu0.b32.end [16/16] 0.0, 128
    %v144 = vpop.trf.xlu0
    %v145 = vpop.trf.xlu0
    %v146 = vpop.trf.xlu0
    %v147 = vpop.trf.xlu0
    %v148 = vpop.trf.xlu0
    %v149 = vpop.trf.xlu0
    %v150 = vpop.trf.xlu0
    %v151 = vpop.trf.xlu0
    %v152 = vpop.trf.xlu0
    %v153 = vpop.trf.xlu0
    %v154 = vpop.trf.xlu0
    %v155 = vpop.trf.xlu0
    %v156 = vpop.trf.xlu0
    %v157 = vpop.trf.xlu0
    %v158 = vpop.trf.xlu0
    %v159 = vpop.trf.xlu0
    %v160 = vperm.slane %v144, 0
    %v161 = vlaneseq
    %v162 = vshrl.u32 %v161, 7
    %164 = vset.pattern.permute.xlu0 %v162
    %165 = vperm.xlu0 %164, %v160
    %v166 = vpop.permute.xlu0 %165
    %v167 = vperm.slane %v144, 1
    %v168 = vlaneseq
    %v169 = vshrl.u32 %v168, 7
    %171 = vset.pattern.permute.xlu0 %v169
    %172 = vperm.xlu0 %171, %v167
    %v173 = vpop.permute.xlu0 %172
    %v174 = vperm.slane %v144, 2
    %v175 = vlaneseq
    %v176 = vshrl.u32 %v175, 7
    %178 = vset.pattern.permute.xlu0 %v176
    %179 = vperm.xlu0 %178, %v174
    %v180 = vpop.permute.xlu0 %179
    %v181 = vperm.slane %v144, 3
    %v182 = vlaneseq
    %v183 = vshrl.u32 %v182, 7
    %185 = vset.pattern.permute.xlu0 %v183
    %186 = vperm.xlu0 %185, %v181
    %v187 = vpop.permute.xlu0 %186
    %v188 = vperm.slane %v144, 4
    %v189 = vlaneseq
    %v190 = vshrl.u32 %v189, 7
    %192 = vset.pattern.permute.xlu0 %v190
    %193 = vperm.xlu0 %192, %v188
    %v194 = vpop.permute.xlu0 %193
    %v195 = vperm.slane %v144, 5
    %v196 = vlaneseq
    %v197 = vshrl.u32 %v196, 7
    %199 = vset.pattern.permute.xlu0 %v197
    %200 = vperm.xlu0 %199, %v195
    %v201 = vpop.permute.xlu0 %200
    %v202 = vperm.slane %v144, 6
    %v203 = vlaneseq
    %v204 = vshrl.u32 %v203, 7
    %206 = vset.pattern.permute.xlu0 %v204
    %207 = vperm.xlu0 %206, %v202
    %v208 = vpop.permute.xlu0 %207
    %v209 = vperm.slane %v144, 7
    %v210 = vlaneseq
    %v211 = vshrl.u32 %v210, 7
    %213 = vset.pattern.permute.xlu0 %v211
    %214 = vperm.xlu0 %213, %v209
    %v215 = vpop.permute.xlu0 %214
    %v216 = vmul.f32 %v166, %v35
    %v217 = vmul.f32 %v173, %v36
    %v218 = vmul.f32 %v180, %v37
    %v219 = vmul.f32 %v187, %v38
    %v220 = vmul.f32 %v194, %v39
    %v221 = vmul.f32 %v201, %v40
    %v222 = vmul.f32 %v208, %v41
    %v223 = vmul.f32 %v215, %v42
    %vm224 = vcmask 519168
    %v225 = vsel %vm224, %v216, 0.0
    %v226 = vsel %vm224, %v217, 0.0
    %v227 = vadd.f32 %v225, %v226
    %v228 = vsel %vm224, %v218, 0.0
    %v229 = vadd.f32 %v227, %v228
    %v230 = vsel %vm224, %v219, 0.0
    %v231 = vadd.f32 %v229, %v230
    %v232 = vsel %vm224, %v220, 0.0
    %v233 = vadd.f32 %v231, %v232
    %v234 = vsel %vm224, %v221, 0.0
    %v235 = vadd.f32 %v233, %v234
    %v236 = vsel %vm224, %v222, 0.0
    %v237 = vadd.f32 %v235, %v236
    %v238 = vsel %vm224, %v223, 0.0
    %v239 = vadd.f32 %v237, %v238
    %v240 = vld [vmem:[%s6] sm:$0xff]
    %v241 = vld [vmem:[%s6 + $0x8] sm:$0xff]
    %v242 = vld [vmem:[%s6 + $0x10] sm:$0xff]
    %v243 = vld [vmem:[%s6 + $0x18] sm:$0xff]
    %v244 = vld [vmem:[%s7] sm:$0xff]
    %v245 = vld [vmem:[%s7 + $0x8] sm:$0xff]
    %v246 = vld [vmem:[%s7 + $0x10] sm:$0xff]
    %v247 = vld [vmem:[%s7 + $0x18] sm:$0xff]
    %v248 = vld [vmem:[%s7 + $0x20] sm:$0xff]
    %v249 = vld [vmem:[%s7 + $0x28] sm:$0xff]
    %v250 = vld [vmem:[%s7 + $0x30] sm:$0xff]
    %v251 = vld [vmem:[%s7 + $0x38] sm:$0xff]
    %vm252 = vcmask 523264
    %v254 = vsel %vm252, %v239, 0
    %256 = vmatpush.msra.mxu0 0.0
    %257 = vmatpush.msra.mxu0 0.0
    %258 = vmatpush.msra.mxu0 0.0
    %259 = vmatpush.msra.mxu0 0.0
    %260 = vmatpush.msra.mxu0 0.0
    %261 = vmatpush.msra.mxu0 0.0
    %262 = vmatpush.msra.mxu0 0.0
    %263 = vmatpush.msra.mxu0 0.0
    %264 = vmatpush.msra.mxu0 %v251
    %265 = vmatpush.msra.mxu0 %v250
    %266 = vmatpush.msra.mxu0 %v249
    %267 = vmatpush.msra.mxu0 %v248
    %268 = vmatpush.msra.mxu0 %v247
    %269 = vmatpush.msra.mxu0 %v246
    %270 = vmatpush.msra.mxu0 %v245
    %271 = vmatpush.msra.mxu0 %v244
    %272 = vmatmul.f32.gmra.mxu0 %v254
    %v273 = vpop.f32.mrf.mxu0
    %v274 = vadd.f32 0.0, %v273
    %275 = vdwg.mxu0
    %276 = vmatpush.msra.mxu0 0.0
    %277 = vmatpush.msra.mxu0 0.0
    %278 = vmatpush.msra.mxu0 0.0
    %279 = vmatpush.msra.mxu0 0.0
    %280 = vmatpush.msra.mxu0 0.0
    %281 = vmatpush.msra.mxu0 0.0
    %282 = vmatpush.msra.mxu0 0.0
    %283 = vmatpush.msra.mxu0 0.0
    %284 = vmatpush.msra.mxu0 0.0
    %285 = vmatpush.msra.mxu0 0.0
    %286 = vmatpush.msra.mxu0 0.0
    %287 = vmatpush.msra.mxu0 0.0
    %288 = vmatpush.msra.mxu0 %v243
    %289 = vmatpush.msra.mxu0 %v242
    %290 = vmatpush.msra.mxu0 %v241
    %291 = vmatpush.msra.mxu0 %v240
    %292 = vmatmul.f32.gmra.mxu0 %v76
    %v293 = vpop.f32.mrf.mxu0
    %v294 = vadd.f32 %v274, %v293
    %295 = vdwg.mxu0
    %v296 = vld [vmem:[%s8] sm:$0x1]
    %v298 = vperm.slane %v296, 0
    %v300 = vadd.f32 %v294, %v298
    %vm301 = vcmask 257024
    %302 = vst.msk [vmem:[#allocation2] sm:$0xf] %vm301, %v300
    // Predicated region
    $region38: #{tpu_custom_call.1} parent=1 // pred_check
      _
    $region39: #{tpu_custom_call.1} parent=1 // pred_check_branch
      %304 = sbr.rel (0) target = $region41
    $region40: #{tpu_custom_call.1} parent=1 // pred_region
      %306 = vsyncadd [#allocation3], 0
      %s308 = sshll.u32 [#allocation2], 4
      %s309 = int_to_ptr.vmem [resolvable:$true] %s308
      %s310 = sshll.u32 %s9, 4
      %s311 = int_to_ptr.hbm [resolvable:$true] %s310
      %313 = dma.vmem_to_hbm [thread:$0]  %s309, 64, %s311, [#allocation3]
    $region41: #{tpu_custom_call.1} parent=1 // pred_fallthru
      _
    // Predicated region
    $region42: #{tpu_custom_call.1} parent=1 // pred_check
      _
    $region43: #{tpu_custom_call.1} parent=1 // pred_check_branch
      %315 = sbr.rel (0) target = $region45
    $region44: #{tpu_custom_call.1} parent=1 // pred_region
      %317 = dma.done [#allocation3], 64
    $region45: #{tpu_custom_call.1} parent=1 // pred_fallthru
      _
    %318 = vsyncpa [#allocation3], 1

</llo_original>
